<compile_context>
chip_gen: v5e
topology: v5e:2x2
jax: 0.10.0
libtpu: 0.0.40
codegen_flags: <defaults>
</compile_context>

<pallas_src>
import jax
import jax.numpy as jnp
from jax.experimental import pallas as pl
from jax.experimental.pallas import tpu as pltpu

_LANES = 128
_TILE_ROWS_TARGET = 8192       # 8192 rows x 128 lanes x 4 B = 4 MiB per f32 stream tile


def _cdiv(a, b):
    return -(-a // b)


def _round_up(a, b):
    return _cdiv(a, b) * b


def _sublane_mult(dtype):
    # Native sublane packing: 8 rows for 32-bit, 16 for 16-bit, 32 for 8-bit dtypes.
    return max(8, 32 // jnp.dtype(dtype).itemsize)


def _lane_dense(x):
    """(rows, 128) lane-dense view of x. Pure (free) reshape when x.size % 128 == 0."""
    flat = x.reshape(-1)
    rows = _cdiv(flat.size, _LANES)
    if flat.size != rows * _LANES:
        # TODO(synk): rare path — a lane remainder forces one small pad copy; typical
        # NN tensors are % 128 == 0 so this never triggers in practice.
        flat = jnp.pad(flat, (0, rows * _LANES - flat.size))
    return flat.reshape(rows, _LANES), rows


def _make_kernel(rows_attn, tr_attn, n_tiles_attn, rows_mse, tr_mse, n_tiles_mse):
    """Kernel closure over the static tiling parameters."""

    def kernel(logits_ref, tgt_ref, pattn_ref, pred_ref, mtgt_ref, out_ref):
        t = pl.program_id(0)
        row = jax.lax.broadcasted_iota(jnp.int32, out_ref.shape, 1)    # sublane index
        lane = jax.lax.broadcasted_iota(jnp.int32, out_ref.shape, 2)   # lane index
        out_ref[...] = jnp.zeros(out_ref.shape, out_ref.dtype)

        # ---- attention-pattern partial sum (gated: pattn may have fewer tiles) ----
        @pl.when(t < n_tiles_attn)
        def _():
            valid = rows_attn - t * tr_attn          # rows of this tile inside the array
            r = jax.lax.broadcasted_iota(jnp.int32, pattn_ref.shape, 0)
            x = jnp.where(r < valid, pattn_ref[...].astype(jnp.float32), 0.0)
            s = jnp.sum(x, axis=0, keepdims=True).reshape(1, 1, _LANES)  # lane partials
            out_ref[...] += jnp.where(row == 0, s, 0.0)

        # ---- MSE squared-error partial sum ----
        @pl.when(t < n_tiles_mse)
        def _():
            valid = rows_mse - t * tr_mse
            r = jax.lax.broadcasted_iota(jnp.int32, pred_ref.shape, 0)
            d = pred_ref[...].astype(jnp.float32) - mtgt_ref[...].astype(jnp.float32)
            d2 = jnp.where(r < valid, d * d, 0.0)
            s = jnp.sum(d2, axis=0, keepdims=True).reshape(1, 1, _LANES)
            out_ref[...] += jnp.where(row == 2, s, 0.0)

        # ---- cross-entropy sum: logits are tiny vs. the streams -> once, on the LAST
        # grid step so it does not delay pipeline ramp-up.
        # TODO(synk): tile the CE branch too if N*C ever becomes large.
        @pl.when(t == pl.num_programs(0) - 1)
        def _():
            logits = logits_ref[...].astype(jnp.float32)                 # (N, C)
            n, c = logits.shape
            m = jnp.max(logits, axis=1, keepdims=True)
            lse = m + jnp.log(jnp.sum(jnp.exp(logits - m), axis=1, keepdims=True))
            col = jax.lax.broadcasted_iota(jnp.int32, (n, c), 1)
            onehot = (col == tgt_ref[...]).astype(jnp.float32)           # (N,1) -> (N,C)
            picked = jnp.sum(onehot * logits, axis=1, keepdims=True)     # logit @ target
            s_ce = jnp.sum(lse - picked)                                 # un-normalized
            out_ref[...] += jnp.where(jnp.logical_and(row == 1, lane == 0), s_ce, 0.0)

    return kernel


def generator_loss_wrapper(log_vars, output, target):
    """output = (logits, _, pattn, mse_target, mse_pred); target = int class ids (N,)."""
    logits = output[0]            # native dtype; cast to f32 only inside the kernel
    pattn = output[2]
    mse_tgt = output[3]
    mse_pred = output[4]

    n_ce, n_cls = logits.shape
    n_mse = mse_pred.size

    # Lane-dense (rows, 128) views — no padding copies for % 128 sizes.
    pattn2d, rows_attn = _lane_dense(pattn)
    pred2d, rows_mse = _lane_dense(mse_pred)
    mtgt2d, rows_mse2 = _lane_dense(mse_tgt)
    assert rows_mse == rows_mse2, "MSE pred/target must have identical shapes"

    # Grid sizing: 1 tile for small inputs; otherwise >= 4 tiles (>= 2 per v7x core).
    dominant_rows = max(rows_attn, rows_mse)
    if dominant_rows <= _TILE_ROWS_TARGET:
        num_tiles = 1
    else:
        num_tiles = max(4, _cdiv(dominant_rows, _TILE_ROWS_TARGET))

    # Per-stream tile rows, rounded to the native sublane packing of the dtype.
    mult_attn = _sublane_mult(pattn.dtype)
    mult_mse = max(_sublane_mult(mse_pred.dtype), _sublane_mult(mse_tgt.dtype))
    tr_attn = _round_up(max(1, _cdiv(rows_attn, num_tiles)), mult_attn)
    tr_mse = _round_up(max(1, _cdiv(rows_mse, num_tiles)), mult_mse)
    n_tiles_attn = _cdiv(rows_attn, tr_attn)
    n_tiles_mse = _cdiv(rows_mse, tr_mse)

    tgt2d = target.astype(jnp.int32).reshape(-1, 1)

    kernel = _make_kernel(rows_attn, tr_attn, n_tiles_attn,
                          rows_mse, tr_mse, n_tiles_mse)

    isz = lambda a: jnp.dtype(a.dtype).itemsize
    stream_tile_bytes = (tr_attn * _LANES * isz(pattn)
                         + tr_mse * _LANES * (isz(mse_pred) + isz(mse_tgt)))
    vmem_bytes = (2 * stream_tile_bytes                         # double-buffered streams
                  + logits.size * isz(logits) + tgt2d.size * 4  # resident CE block
                  + 2 * 8 * _LANES * 4                          # output double buffer
                  + (2 << 20))                                  # headroom
    vmem_limit = int(min(max(vmem_bytes, 16 << 20), 48 << 20))

    in_bytes = (logits.size * isz(logits) + tgt2d.size * 4
                + pattn.size * isz(pattn)
                + mse_pred.size * isz(mse_pred) + mse_tgt.size * isz(mse_tgt))
    cost = pl.CostEstimate(
        flops=int(pattn.size + 3 * n_mse + 6 * n_ce * n_cls),
        transcendentals=int(n_ce * n_cls + n_ce),
        bytes_accessed=int(in_bytes + num_tiles * 8 * _LANES * 4))

    partials = pl.pallas_call(
        kernel,
        out_shape=jax.ShapeDtypeStruct((num_tiles, 8, _LANES), jnp.float32),
        grid=(num_tiles,),
        in_specs=[
            pl.BlockSpec((n_ce, n_cls), lambda t: (0, 0)),       # logits (resident)
            pl.BlockSpec((n_ce, 1), lambda t: (0, 0)),           # class targets
            # Clamped index maps: streams with fewer tiles than the grid keep the same
            # block index on later steps -> Pallas skips the re-DMA.
            pl.BlockSpec((tr_attn, _LANES),
                         lambda t: (jnp.minimum(t, n_tiles_attn - 1), 0)),
            pl.BlockSpec((tr_mse, _LANES),
                         lambda t: (jnp.minimum(t, n_tiles_mse - 1), 0)),
            pl.BlockSpec((tr_mse, _LANES),
                         lambda t: (jnp.minimum(t, n_tiles_mse - 1), 0)),
        ],
        out_specs=pl.BlockSpec((1, 8, _LANES), lambda t: (t, 0, 0)),
        compiler_params=pltpu.CompilerParams(
            dimension_semantics=("arbitrary",) if num_tiles == 1 else ("parallel",),
            vmem_limit_bytes=vmem_limit,
        ),
        cost_estimate=cost,
    )(logits, tgt2d, pattn2d, pred2d, mtgt2d)

    # Tiny epilogue: cross-tile + cross-lane combine, true mean normalizers, then the
    # uncertainty weighting exp(-log_var) * loss + log_var.
    loss0 = jnp.sum(partials[:, 0, :])
    loss1 = jnp.sum(partials[:, 1, :]) / n_ce
    loss2 = jnp.sum(partials[:, 2, :]) / n_mse

    lv = log_vars.astype(jnp.float32)
    return (jnp.exp(-lv[0]) * loss0 + lv[0]
            + jnp.exp(-lv[1]) * loss1 + lv[1]
            + jnp.exp(-lv[2]) * loss2 + lv[2])


def _reference(log_vars, output, target):
    logits = output[0].astype(jnp.float32)
    pattn = output[2].astype(jnp.float32)
    mse_tgt = output[3].astype(jnp.float32)
    mse_pred = output[4].astype(jnp.float32)

    loss0 = jnp.sum(pattn)
    logz = jax.nn.logsumexp(logits, axis=1)
    picked = jnp.take_along_axis(logits, target[:, None].astype(jnp.int32), axis=1)[:, 0]
    loss1 = jnp.mean(logz - picked)
    loss2 = jnp.mean((mse_pred - mse_tgt) ** 2)

    lv = log_vars.astype(jnp.float32)
    return (jnp.exp(-lv[0]) * loss0 + lv[0]
            + jnp.exp(-lv[1]) * loss1 + lv[1]
            + jnp.exp(-lv[2]) * loss2 + lv[2])


if __name__ == "__main__":
    key = jax.random.PRNGKey(0)
    k0, k1, k2, k3, k4 = jax.random.split(key, 5)

    task_num = 3
    # Parameter init exactly as in the module's __init__: zeros(task_num).
    log_vars = jnp.zeros((task_num,), dtype=jnp.float32)

    N, C = 8, 32                 # classification: batch=8, classes=32
    B, CH, H, W = 2, 4, 16, 16   # NCHW tensors for the MSE branch
    HEADS, S = 4, 8              # attention pattern (B, heads, S, S)

    logits = jax.random.normal(k0, (N, C), dtype=jnp.float32)             # output[0]
    pattn = jax.random.uniform(k1, (B, HEADS, S, S), dtype=jnp.float32)   # output[2]
    mse_target = jax.random.normal(k2, (B, CH, H, W), dtype=jnp.float32)  # output[3]
    mse_pred = jax.random.normal(k3, (B, CH, H, W), dtype=jnp.float32)    # output[4]
    target = jax.random.randint(k4, (N,), 0, C, dtype=jnp.int32)

    # output[1] is unused by the forward pass; keep a placeholder.
    output = (logits, jnp.zeros((1,), jnp.float32), pattn, mse_target, mse_pred)

    loss = generator_loss_wrapper(log_vars, output, target)
    loss = jax.block_until_ready(loss)

    ref = _reference(log_vars, output, target)
    assert jnp.allclose(loss, ref, rtol=1e-5, atol=1e-5), (loss, ref)

    print("KERNEL_OK")
</pallas_src>

<mosaic_0001>
module attributes {stable_mosaic.version = 11 : i64} {
  func.func @kernel(%arg0: i32, %arg1: memref<8x32xf32, #tpu.memory_space<vmem>>, %arg2: memref<8x1xi32, #tpu.memory_space<vmem>>, %arg3: memref<8x128xf32, #tpu.memory_space<vmem>>, %arg4: memref<16x128xf32, #tpu.memory_space<vmem>>, %arg5: memref<16x128xf32, #tpu.memory_space<vmem>>, %arg6: memref<1x8x128xf32, #tpu.memory_space<vmem>>) attributes {dimension_semantics = [#tpu.dimension_semantics<arbitrary>], iteration_bounds = array<i64: 1>, scalar_prefetch = 0 : i64, scratch_operands = 0 : i64, tpu.core_type = #tpu.core_type<tc>, window_params = [{pipeline_mode = #tpu.pipeline_mode<synchronous>, transform_indices = @transform_0, window_bounds = array<i64: 8, 32>}, {pipeline_mode = #tpu.pipeline_mode<synchronous>, transform_indices = @transform_1, window_bounds = array<i64: 8, 1>}, {transform_indices = @transform_2, window_bounds = array<i64: 8, 128>}, {transform_indices = @transform_3, window_bounds = array<i64: 16, 128>}, {transform_indices = @transform_4, window_bounds = array<i64: 16, 128>}, {transform_indices = @transform_5, window_bounds = array<i64: 1, 8, 128>}]} {
    %0 = tpu.iota {dimensions = array<i32: 1>} : vector<1x8x128xi32>
    %1 = tpu.iota {dimensions = array<i32: 2>} : vector<1x8x128xi32>
    %cst = arith.constant 0.000000e+00 : f32
    %2 = vector.broadcast %cst : f32 to vector<1x8x128xf32>
    %c0 = arith.constant 0 : index
    %c0_0 = arith.constant 0 : index
    %c0_1 = arith.constant 0 : index
    %3 = vector.load %arg6[%c0, %c0_0, %c0_1] : memref<1x8x128xf32, #tpu.memory_space<vmem>>, vector<1x8x128xf32>
    tpu.vector_store %arg6[%c0, %c0_0, %c0_1], %2 {strides = array<i32>} : memref<1x8x128xf32, #tpu.memory_space<vmem>>, vector<1x8x128xf32>,
    %c1_i32 = arith.constant 1 : i32
    %4 = arith.cmpi slt, %arg0, %c1_i32 : i32
    %5 = arith.extui %4 : i1 to i32
    %c0_i32 = arith.constant 0 : i32
    %6 = arith.cmpi ne, %5, %c0_i32 : i32
    scf.if %6 {
      %c8_i32 = arith.constant 8 : i32
      %13 = arith.muli %arg0, %c8_i32 : i32
      %c4_i32 = arith.constant 4 : i32
      %14 = arith.subi %c4_i32, %13 : i32
      %15 = tpu.iota {dimensions = array<i32: 0>} : vector<8x128xi32>
      %16 = vector.broadcast %14 : i32 to vector<8x128xi32>
      %17 = arith.cmpi slt, %15, %16 : vector<8x128xi32>
      %c0_6 = arith.constant 0 : index
      %c0_7 = arith.constant 0 : index
      %18 = vector.load %arg3[%c0_6, %c0_7] : memref<8x128xf32, #tpu.memory_space<vmem>>, vector<8x128xf32>
      %cst_8 = arith.constant 0.000000e+00 : f32
      %19 = vector.broadcast %cst_8 : f32 to vector<8x128xf32>
      %20 = arith.select %17, %18, %19 : vector<8x128xi1>, vector<8x128xf32>
      %cst_9 = arith.constant dense<0.000000e+00> : vector<128xf32>
      %21 = vector.multi_reduction <add>, %20, %cst_9 [0] : vector<8x128xf32> to vector<128xf32>
      %22 = vector.shape_cast %21 : vector<128xf32> to vector<1x128xf32>
      %23 = vector.shape_cast %22 : vector<1x128xf32> to vector<1x1x128xf32>
      %c0_10 = arith.constant 0 : index
      %c0_11 = arith.constant 0 : index
      %c0_12 = arith.constant 0 : index
      %24 = vector.load %arg6[%c0_10, %c0_11, %c0_12] : memref<1x8x128xf32, #tpu.memory_space<vmem>>, vector<1x8x128xf32>
      %c0_i32_13 = arith.constant 0 : i32
      %25 = vector.broadcast %c0_i32_13 : i32 to vector<1x8x128xi32>
      %26 = arith.cmpi eq, %0, %25 : vector<1x8x128xi32>
      %cst_14 = arith.constant 0.000000e+00 : f32
      %27 = vector.shape_cast %23 : vector<1x1x128xf32> to vector<1x1x128xf32>
      %28 = vector.broadcast %27 : vector<1x1x128xf32> to vector<1x8x128xf32>
      %29 = vector.broadcast %cst_14 : f32 to vector<1x8x128xf32>
      %30 = arith.select %26, %28, %29 : vector<1x8x128xi1>, vector<1x8x128xf32>
      %31 = arith.addf %24, %30 : vector<1x8x128xf32>
      %c0_15 = arith.constant 0 : index
      %c0_16 = arith.constant 0 : index
      %c0_17 = arith.constant 0 : index
      %32 = vector.load %arg6[%c0_15, %c0_16, %c0_17] : memref<1x8x128xf32, #tpu.memory_space<vmem>>, vector<1x8x128xf32>
      tpu.vector_store %arg6[%c0_15, %c0_16, %c0_17], %31 {strides = array<i32>} : memref<1x8x128xf32, #tpu.memory_space<vmem>>, vector<1x8x128xf32>,
    } else {
    }
    %c1_i32_2 = arith.constant 1 : i32
    %7 = arith.cmpi slt, %arg0, %c1_i32_2 : i32
    %8 = arith.extui %7 : i1 to i32
    %c0_i32_3 = arith.constant 0 : i32
    %9 = arith.cmpi ne, %8, %c0_i32_3 : i32
    scf.if %9 {
      %c16_i32 = arith.constant 16 : i32
      %13 = arith.muli %arg0, %c16_i32 : i32
      %c16_i32_6 = arith.constant 16 : i32
      %14 = arith.subi %c16_i32_6, %13 : i32
      %15 = tpu.iota {dimensions = array<i32: 0>} : vector<16x128xi32>
      %c0_7 = arith.constant 0 : index
      %c0_8 = arith.constant 0 : index
      %16 = vector.load %arg4[%c0_7, %c0_8] : memref<16x128xf32, #tpu.memory_space<vmem>>, vector<16x128xf32>
      %c0_9 = arith.constant 0 : index
      %c0_10 = arith.constant 0 : index
      %17 = vector.load %arg5[%c0_9, %c0_10] : memref<16x128xf32, #tpu.memory_space<vmem>>, vector<16x128xf32>
      %18 = arith.subf %16, %17 : vector<16x128xf32>
      %19 = vector.broadcast %14 : i32 to vector<16x128xi32>
      %20 = arith.cmpi slt, %15, %19 : vector<16x128xi32>
      %21 = arith.mulf %18, %18 : vector<16x128xf32>
      %cst_11 = arith.constant 0.000000e+00 : f32
      %22 = vector.broadcast %cst_11 : f32 to vector<16x128xf32>
      %23 = arith.select %20, %21, %22 : vector<16x128xi1>, vector<16x128xf32>
      %cst_12 = arith.constant dense<0.000000e+00> : vector<128xf32>
      %24 = vector.multi_reduction <add>, %23, %cst_12 [0] : vector<16x128xf32> to vector<128xf32>
      %25 = vector.shape_cast %24 : vector<128xf32> to vector<1x128xf32>
      %26 = vector.shape_cast %25 : vector<1x128xf32> to vector<1x1x128xf32>
      %c0_13 = arith.constant 0 : index
      %c0_14 = arith.constant 0 : index
      %c0_15 = arith.constant 0 : index
      %27 = vector.load %arg6[%c0_13, %c0_14, %c0_15] : memref<1x8x128xf32, #tpu.memory_space<vmem>>, vector<1x8x128xf32>
      %c2_i32 = arith.constant 2 : i32
      %28 = vector.broadcast %c2_i32 : i32 to vector<1x8x128xi32>
      %29 = arith.cmpi eq, %0, %28 : vector<1x8x128xi32>
      %cst_16 = arith.constant 0.000000e+00 : f32
      %30 = vector.shape_cast %26 : vector<1x1x128xf32> to vector<1x1x128xf32>
      %31 = vector.broadcast %30 : vector<1x1x128xf32> to vector<1x8x128xf32>
      %32 = vector.broadcast %cst_16 : f32 to vector<1x8x128xf32>
      %33 = arith.select %29, %31, %32 : vector<1x8x128xi1>, vector<1x8x128xf32>
      %34 = arith.addf %27, %33 : vector<1x8x128xf32>
      %c0_17 = arith.constant 0 : index
      %c0_18 = arith.constant 0 : index
      %c0_19 = arith.constant 0 : index
      %35 = vector.load %arg6[%c0_17, %c0_18, %c0_19] : memref<1x8x128xf32, #tpu.memory_space<vmem>>, vector<1x8x128xf32>
      tpu.vector_store %arg6[%c0_17, %c0_18, %c0_19], %34 {strides = array<i32>} : memref<1x8x128xf32, #tpu.memory_space<vmem>>, vector<1x8x128xf32>,
    } else {
    }
    %c0_i32_4 = arith.constant 0 : i32
    %10 = arith.cmpi eq, %arg0, %c0_i32_4 : i32
    %11 = arith.extui %10 : i1 to i32
    %c0_i32_5 = arith.constant 0 : i32
    %12 = arith.cmpi ne, %11, %c0_i32_5 : i32
    scf.if %12 {
      %c0_6 = arith.constant 0 : index
      %c0_7 = arith.constant 0 : index
      %13 = vector.load %arg1[%c0_6, %c0_7] : memref<8x32xf32, #tpu.memory_space<vmem>>, vector<8x32xf32>
      %cst_8 = arith.constant dense<0xFF800000> : vector<8xf32>
      %14 = vector.multi_reduction <maximumf>, %13, %cst_8 [1] : vector<8x32xf32> to vector<8xf32>
      %15 = vector.shape_cast %14 : vector<8xf32> to vector<8x1xf32>
      %16 = vector.broadcast %15 : vector<8x1xf32> to vector<8x32xf32>
      %17 = arith.subf %13, %16 : vector<8x32xf32>
      %18 = math.exp %17 : vector<8x32xf32>
      %cst_9 = arith.constant dense<0.000000e+00> : vector<8xf32>
      %19 = vector.multi_reduction <add>, %18, %cst_9 [1] : vector<8x32xf32> to vector<8xf32>
      %20 = vector.shape_cast %19 : vector<8xf32> to vector<8x1xf32>
      %21 = math.log %20 : vector<8x1xf32>
      %22 = arith.addf %15, %21 : vector<8x1xf32>
      %23 = tpu.iota {dimensions = array<i32: 1>} : vector<8x32xi32>
      %c0_10 = arith.constant 0 : index
      %c0_11 = arith.constant 0 : index
      %24 = vector.load %arg2[%c0_10, %c0_11] : memref<8x1xi32, #tpu.memory_space<vmem>>, vector<8x1xi32>
      %25 = vector.broadcast %24 : vector<8x1xi32> to vector<8x32xi32>
      %26 = arith.cmpi eq, %23, %25 : vector<8x32xi32>
      %27 = arith.extui %26 : vector<8x32xi1> to vector<8x32xi32>
      %28 = arith.sitofp %27 : vector<8x32xi32> to vector<8x32xf32>
      %29 = arith.mulf %28, %13 : vector<8x32xf32>
      %cst_12 = arith.constant dense<0.000000e+00> : vector<8xf32>
      %30 = vector.multi_reduction <add>, %29, %cst_12 [1] : vector<8x32xf32> to vector<8xf32>
      %31 = vector.shape_cast %30 : vector<8xf32> to vector<8x1xf32>
      %32 = arith.subf %22, %31 : vector<8x1xf32>
      %33 = vector.shape_cast %32 : vector<8x1xf32> to vector<1x8x1xf32>
      %cst_13 = arith.constant dense<0.000000e+00> : vector<1xf32>
      %34 = vector.multi_reduction <add>, %33, %cst_13 [1, 2] : vector<1x8x1xf32> to vector<1xf32>
      %35 = vector.shape_cast %34 : vector<1xf32> to vector<1x1x1xf32>
      %36 = vector.extract %35[0, 0, 0] : f32 from vector<1x1x1xf32>
      %c0_14 = arith.constant 0 : index
      %c0_15 = arith.constant 0 : index
      %c0_16 = arith.constant 0 : index
      %37 = vector.load %arg6[%c0_14, %c0_15, %c0_16] : memref<1x8x128xf32, #tpu.memory_space<vmem>>, vector<1x8x128xf32>
      %c1_i32_17 = arith.constant 1 : i32
      %38 = vector.broadcast %c1_i32_17 : i32 to vector<1x8x128xi32>
      %39 = arith.cmpi eq, %0, %38 : vector<1x8x128xi32>
      %c0_i32_18 = arith.constant 0 : i32
      %40 = vector.broadcast %c0_i32_18 : i32 to vector<1x8x128xi32>
      %41 = arith.cmpi eq, %1, %40 : vector<1x8x128xi32>
      %42 = arith.andi %39, %41 : vector<1x8x128xi1>
      %cst_19 = arith.constant 0.000000e+00 : f32
      %43 = vector.broadcast %36 : f32 to vector<1x8x128xf32>
      %44 = vector.broadcast %cst_19 : f32 to vector<1x8x128xf32>
      %45 = arith.select %42, %43, %44 : vector<1x8x128xi1>, vector<1x8x128xf32>
      %46 = arith.addf %37, %45 : vector<1x8x128xf32>
      %c0_20 = arith.constant 0 : index
      %c0_21 = arith.constant 0 : index
      %c0_22 = arith.constant 0 : index
      %47 = vector.load %arg6[%c0_20, %c0_21, %c0_22] : memref<1x8x128xf32, #tpu.memory_space<vmem>>, vector<1x8x128xf32>
      tpu.vector_store %arg6[%c0_20, %c0_21, %c0_22], %46 {strides = array<i32>} : memref<1x8x128xf32, #tpu.memory_space<vmem>>, vector<1x8x128xf32>,
    } else {
    }
    return
  }
  func.func @transform_0(%arg0: i32) -> (i32, i32) {
    %c0_i32 = arith.constant 0 : i32
    %c0_i32_0 = arith.constant 0 : i32
    %c0_i32_1 = arith.constant 0 : i32
    return %c0_i32, %c0_i32_0 : i32, i32
  }
  func.func @transform_1(%arg0: i32) -> (i32, i32) {
    %c0_i32 = arith.constant 0 : i32
    %c0_i32_0 = arith.constant 0 : i32
    %c0_i32_1 = arith.constant 0 : i32
    return %c0_i32, %c0_i32_0 : i32, i32
  }
  func.func @transform_2(%arg0: i32) -> (i32, i32) {
    %c0_i32 = arith.constant 0 : i32
    %0 = arith.minsi %arg0, %c0_i32 : i32
    %c0_i32_0 = arith.constant 0 : i32
    %c0_i32_1 = arith.constant 0 : i32
    return %0, %c0_i32_0 : i32, i32
  }
  func.func @transform_3(%arg0: i32) -> (i32, i32) {
    %c0_i32 = arith.constant 0 : i32
    %0 = arith.minsi %arg0, %c0_i32 : i32
    %c0_i32_0 = arith.constant 0 : i32
    %c0_i32_1 = arith.constant 0 : i32
    return %0, %c0_i32_0 : i32, i32
  }
  func.func @transform_4(%arg0: i32) -> (i32, i32) {
    %c0_i32 = arith.constant 0 : i32
    %0 = arith.minsi %arg0, %c0_i32 : i32
    %c0_i32_0 = arith.constant 0 : i32
    %c0_i32_1 = arith.constant 0 : i32
    return %0, %c0_i32_0 : i32, i32
  }
  func.func @transform_5(%arg0: i32) -> (i32, i32, i32) {
    %c0_i32 = arith.constant 0 : i32
    %c0_i32_0 = arith.constant 0 : i32
    %c0_i32_1 = arith.constant 0 : i32
    return %arg0, %c0_i32, %c0_i32_0 : i32, i32, i32
  }
}

</mosaic_0001>

<llo_original>
// kernel: tpu_custom_call.1
$region0: #{tpu_custom_call.1}
  #allocation0 [shape = 'u32[]', space=smem, size = 0x4, offset = 0x4, fixed_abs, tag = 'smem constant byte address 0x4 - core index']
  #allocation1 [shape = 'u32[72,128]{1,0:T(1,128)}', space=vmem, size = 0x9000, scoped, tag = 'internal scratch']
  %s0 = inlined_call_operand.vmem [shape: f32[8,32], index: 0, kind: input, shape index: {}]
  %s1 = inlined_call_operand.vmem [shape: s32[8,1], index: 1, kind: input, shape index: {}]
  %s2 = inlined_call_operand.hbm [shape: f32[4,128], index: 2, kind: input, shape index: {}]
  %s3 = inlined_call_operand.hbm [shape: f32[16,128], index: 3, kind: input, shape index: {}]
  %s4 = inlined_call_operand.hbm [shape: f32[16,128], index: 4, kind: input, shape index: {}]
  %s5 = inlined_call_operand.hbm [shape: f32[1,8,128], index: 5, kind: output, shape index: {}]
  %s6 = sld [smem:[#allocation0]]
  $region50: #{tpu_custom_call.1} parent=0
    _
  %s8 = ssub.s32 1, %s6
  %s9 = scalar_select 0, %s8, %s6
  $region1: #{tpu_custom_call.1} parent=0
    #allocation2 [shape = 'u8[4096]{0}', space=vmem, size = 0x1000, scoped, tag = 'input window, operand 2, single buffered']
    #allocation3 [shape = 's32[1]{0}', space=sflag, size = 0x4, scoped, tag = 'scoped memory for tpu_custom_call.1']
    #allocation4 [shape = 's32[1]{0}', space=sflag, size = 0x4, scoped, tag = 'scoped memory for tpu_custom_call.1']
    #allocation5 [shape = 'u8[8192]{0}', space=vmem, size = 0x2000, scoped, tag = 'input window, operand 3, single buffered']
    #allocation6 [shape = 's32[1]{0}', space=sflag, size = 0x4, scoped, tag = 'scoped memory for tpu_custom_call.1']
    #allocation7 [shape = 'u8[8192]{0}', space=vmem, size = 0x2000, scoped, tag = 'input window, operand 4, single buffered']
    #allocation8 [shape = 'u8[4096]{0}', space=vmem, size = 0x1000, scoped, tag = 'output window, operand 0, single buffered']
    %10 = vsyncpa [#allocation3], 0
    %11 = vsyncpa [#allocation6], 0
    %12 = vsyncpa [#allocation4], 0
    // Predicated region
    $region2: #{tpu_custom_call.1} parent=1 // pred_check
      _
    $region3: #{tpu_custom_call.1} parent=1 // pred_check_branch
      %14 = sbr.rel (0) target = $region5
    $region4: #{tpu_custom_call.1} parent=1 // pred_region
      _
    $region5: #{tpu_custom_call.1} parent=1 // pred_fallthru
      _
    // Predicated region
    $region6: #{tpu_custom_call.1} parent=1 // pred_check
      _
    $region7: #{tpu_custom_call.1} parent=1 // pred_check_branch
      %16 = sbr.rel (0) target = $region9
    $region8: #{tpu_custom_call.1} parent=1 // pred_region
      _
    $region9: #{tpu_custom_call.1} parent=1 // pred_fallthru
      _
    // Predicated region
    $region10: #{tpu_custom_call.1} parent=1 // pred_check
      _
    $region11: #{tpu_custom_call.1} parent=1 // pred_check_branch
      %18 = sbr.rel (0) target = $region13
    $region12: #{tpu_custom_call.1} parent=1 // pred_region
      %20 = vsyncadd [#allocation3], 64
      %s21 = sshll.u32 %s2, 4
      %s22 = int_to_ptr.hbm [resolvable:$true] %s21
      %s23 = sshll.u32 [#allocation2], 4
      %s24 = int_to_ptr.vmem [resolvable:$true] %s23
      %29 = dma.hbm_to_vmem [thread:$0]  %s22, 64, %s24, [#allocation3], 64, 64, 4
    $region13: #{tpu_custom_call.1} parent=1 // pred_fallthru
      _
    // Predicated region
    $region14: #{tpu_custom_call.1} parent=1 // pred_check
      _
    $region15: #{tpu_custom_call.1} parent=1 // pred_check_branch
      %31 = sbr.rel (0) target = $region17
    $region16: #{tpu_custom_call.1} parent=1 // pred_region
      %33 = vsyncadd [#allocation6], 0
      %s34 = sshll.u32 %s3, 4
      %s35 = int_to_ptr.hbm [resolvable:$true] %s34
      %s36 = sshll.u32 [#allocation5], 4
      %s37 = int_to_ptr.vmem [resolvable:$true] %s36
      %42 = dma.hbm_to_vmem [thread:$0]  %s35, 256, %s37, [#allocation6], 128, 128, 8
    $region17: #{tpu_custom_call.1} parent=1 // pred_fallthru
      _
    // Predicated region
    $region18: #{tpu_custom_call.1} parent=1 // pred_check
      _
    $region19: #{tpu_custom_call.1} parent=1 // pred_check_branch
      %44 = sbr.rel (0) target = $region21
    $region20: #{tpu_custom_call.1} parent=1 // pred_region
      %46 = vsyncadd [#allocation6], 0
      %s47 = sshll.u32 %s4, 4
      %s48 = int_to_ptr.hbm [resolvable:$true] %s47
      %s49 = sshll.u32 [#allocation7], 4
      %s50 = int_to_ptr.vmem [resolvable:$true] %s49
      %55 = dma.hbm_to_vmem [thread:$0]  %s48, 256, %s50, [#allocation6], 128, 128, 8
    $region21: #{tpu_custom_call.1} parent=1 // pred_fallthru
      _
    // Predicated region
    $region22: #{tpu_custom_call.1} parent=1 // pred_check
      _
    $region23: #{tpu_custom_call.1} parent=1 // pred_check_branch
      %57 = sbr.rel (0) target = $region25
    $region24: #{tpu_custom_call.1} parent=1 // pred_region
      %59 = dma.done [#allocation3], 128
    $region25: #{tpu_custom_call.1} parent=1 // pred_fallthru
      _
    // Predicated region
    $region26: #{tpu_custom_call.1} parent=1 // pred_check
      _
    $region27: #{tpu_custom_call.1} parent=1 // pred_check_branch
      %61 = sbr.rel (0) target = $region29
    $region28: #{tpu_custom_call.1} parent=1 // pred_region
      %63 = dma.done [#allocation6], 256
    $region29: #{tpu_custom_call.1} parent=1 // pred_fallthru
      _
    // Predicated region
    $region30: #{tpu_custom_call.1} parent=1 // pred_check
      _
    $region31: #{tpu_custom_call.1} parent=1 // pred_check_branch
      %65 = sbr.rel (0) target = $region33
    $region32: #{tpu_custom_call.1} parent=1 // pred_region
      %67 = dma.done [#allocation6], 256
    $region33: #{tpu_custom_call.1} parent=1 // pred_fallthru
      _
    %v68 = vlaneseq
    %v69 = vshrl.u32 %v68, 7
    %v70 = vlaneseq
    %v71 = vand.u32 %v70, 127
    %72 = vst [vmem:[#allocation8] sm:$0xff] 0.0
    %p73 = scmp.lt.s32.totalorder 0, 1
    // Predicated region
    $region34: #{tpu_custom_call.1} parent=1 // pred_check
      %p74 = pneg %p73
    $region35: #{tpu_custom_call.1} parent=1 // pred_check_branch
      %76 = sbr.rel (%p74) target = $region37
    $region36: #{tpu_custom_call.1} parent=1 // pred_region
      %s77 = smul.u32 0, 8
      %s78 = ssub.s32 4, %s77
      %v79 = vstv %s78
      %vm80 = vcmp.lt.s32.totalorder %v69, %v79
      %v81 = vld [vmem:[#allocation2] sm:$0xff]
      %v82 = vsel %vm80, %v81, 0.0
      %v83 = vrot.slane %v82, 4
      %v84 = vadd.f32 %v82, %v83
      %v85 = vrot.slane %v84, 2
      %v86 = vadd.f32 %v84, %v85
      %v87 = vrot.slane %v86, 1
      %v88 = vadd.f32 %v86, %v87
      %v89 = vld [vmem:[#allocation8] sm:$0xff]
      %vm90 = vcmp.eq.s32.totalorder %v69, 0
      %v91 = vsel %vm90, %v88, 0.0
      %v92 = vadd.f32 %v89, %v91
      %93 = vst [vmem:[#allocation8] sm:$0xff] %v92
      %s94 = smul.u32 0, 16
      %s95 = ssub.s32 16, %s94
      %v96 = vadd.s32 %v69, 8
      %v97 = vld [vmem:[#allocation5] sm:$0xff]
      %v98 = vld [vmem:[#allocation5 + $0x8] sm:$0xff]
      %v99 = vld [vmem:[#allocation7] sm:$0xff]
      %v100 = vld [vmem:[#allocation7 + $0x8] sm:$0xff]
      %v101 = vsub.f32 %v97, %v99
      %v102 = vsub.f32 %v98, %v100
      %v103 = vstv %s95
      %vm104 = vcmp.lt.s32.totalorder %v69, %v103
      %vm105 = vcmp.lt.s32.totalorder %v96, %v103
      %v106 = vmul.f32 %v101, %v101
      %v107 = vmul.f32 %v102, %v102
      %v108 = vsel %vm104, %v106, 0.0
      %v109 = vsel %vm105, %v107, 0.0
      %v110 = vadd.f32 %v108, %v109
      %v111 = vrot.slane %v110, 4
      %v112 = vadd.f32 %v110, %v111
      %v113 = vrot.slane %v112, 2
      %v114 = vadd.f32 %v112, %v113
      %v115 = vrot.slane %v114, 1
      %v116 = vadd.f32 %v114, %v115
      %v117 = vld [vmem:[#allocation8] sm:$0xff]
      %vm118 = vcmp.eq.s32.totalorder %v69, 2
      %v119 = vsel %vm118, %v116, 0.0
      %v120 = vadd.f32 %v117, %v119
      %121 = vst [vmem:[#allocation8] sm:$0xff] %v120
    $region37: #{tpu_custom_call.1} parent=1 // pred_fallthru
      _
    %p122 = scmp.eq.s32.totalorder 0, 0
    // Predicated region
    $region38: #{tpu_custom_call.1} parent=1 // pred_check
      %p123 = pneg %p122
    $region39: #{tpu_custom_call.1} parent=1 // pred_check_branch
      %125 = sbr.rel (%p123) target = $region41
    $region40: #{tpu_custom_call.1} parent=1 // pred_region
      %v126 = vld [vmem:[%s0] sm:$0xff]
      %vm127 = vcmask 261120
      %v128 = vsel %vm127, %v126, -inf
      %129 = vmax.xlane.f32.xlu0 %v128
      %v130 = vpop.xlane.xlu0 %129
      %v131 = vsub.f32 %v126, %v130
      %v132 = vmul.f32 %v131, 1.442695
      %v133 = vpow.pop %v132
      %v134 = vsel %vm127, %v133, 0.0
      %135 = vadd.xlane.f32.xlu0 %v134
      %v136 = vpop.xlane.xlu0 %135
      %v137 = vlog2.pop %v136
      %v138 = vmul.f32 %v137, 0.6931472
      %v139 = vadd.f32 %v130, %v138
      %v140 = vld [vmem:[%s1] sm:$0xff]
      %141 = vset.pattern.permute.xlu0 0
      %142 = vperm.xlu0 %141, %v140
      %v143 = vpop.permute.xlu0 %142
      %vm144 = vcmp.eq.s32.totalorder %v71, %v143
      %v145 = vsel %vm144, 1, 0
      %v146 = vcvt.s32.f32 %v145
      %v147 = vmul.f32 %v146, %v126
      %v148 = vsel %vm127, %v147, 0.0
      %149 = vadd.xlane.f32.xlu0 %v148
      %v150 = vpop.xlane.xlu0 %149
      %v151 = vsub.f32 %v139, %v150
      %vm152 = vcmask 7168
      %v153 = vsel %vm152, %v151, 0.0
      %154 = vadd.xlane.f32.xlu0 %v153
      %v155 = vpop.xlane.xlu0 %154
      %v156 = vrot.slane %v155, 4
      %v157 = vadd.f32 %v155, %v156
      %v158 = vrot.slane %v157, 2
      %v159 = vadd.f32 %v157, %v158
      %v160 = vrot.slane %v159, 1
      %v161 = vadd.f32 %v159, %v160
      %s162 = vtos %v161
      %v163 = vld [vmem:[#allocation8] sm:$0xff]
      %vm164 = vcmp.eq.s32.totalorder %v69, 1
      %vm165 = vcmp.eq.s32.totalorder %v71, 0
      %vm166 = vmand %vm164, %vm165
      %v167 = vstv %s162
      %v168 = vsel %vm166, %v167, 0.0
      %v169 = vadd.f32 %v163, %v168
      %170 = vst [vmem:[#allocation8] sm:$0xff] %v169
    $region41: #{tpu_custom_call.1} parent=1 // pred_fallthru
      _
    // Predicated region
    $region42: #{tpu_custom_call.1} parent=1 // pred_check
      _
    $region43: #{tpu_custom_call.1} parent=1 // pred_check_branch
      %172 = sbr.rel (0) target = $region45
    $region44: #{tpu_custom_call.1} parent=1 // pred_region
      %174 = vsyncadd [#allocation4], 0
      %s176 = sshll.u32 [#allocation8], 4
      %s177 = int_to_ptr.vmem [resolvable:$true] %s176
      %s178 = sshll.u32 %s5, 4
      %s179 = int_to_ptr.hbm [resolvable:$true] %s178
      %181 = dma.vmem_to_hbm [thread:$0]  %s177, 128, %s179, [#allocation4]
    $region45: #{tpu_custom_call.1} parent=1 // pred_fallthru
      _
    // Predicated region
    $region46: #{tpu_custom_call.1} parent=1 // pred_check
      _
    $region47: #{tpu_custom_call.1} parent=1 // pred_check_branch
      %183 = sbr.rel (0) target = $region49
    $region48: #{tpu_custom_call.1} parent=1 // pred_region
      %185 = dma.done [#allocation4], 128
    $region49: #{tpu_custom_call.1} parent=1 // pred_fallthru
      _
    %186 = vsyncpa [#allocation3], 1
    %187 = vsyncpa [#allocation6], 1
    %188 = vsyncpa [#allocation4], 1

</llo_original>
